<compile_context>
chip_gen: v7x
topology: tpu7x:2x2x1
jax: 0.10.0
libtpu: 0.0.40
codegen_flags: <defaults>
</compile_context>

<pallas_src>
import functools

import jax
import jax.numpy as jnp
from jax import lax
from jax.experimental import pallas as pl
from jax.experimental.pallas import tpu as pltpu


def _round_up(v, m):
    return ((v + m - 1) // m) * m


def _vmem_capacity_bytes():
    """Physical VMEM per TensorCore; conservative (v7x) fallback if unqueryable."""
    try:
        return int(pltpu.get_tpu_info().vmem_capacity_bytes)
    except Exception:
        return 64 * 1024 * 1024


def _shifted(v, axis, delta, edge_mask):
    """v shifted so result[i] = v[i + delta] along `axis`, zero-filled at the edge.

    The roll is an XLU rotate (free slot next to the VPU); the wrapped-around edge is
    forced to zero, which reproduces F.conv2d's zero padding.
    """
    size = v.shape[axis]
    rolled = pltpu.roll(v, (-delta) % size, axis=axis)
    return jnp.where(edge_mask, 0.0, rolled)


def _gradient_loss_kernel(x_ref, y_ref, out_ref, acc_ref, *,
                          n_images, valid_h, valid_w, inv_n,
                          blocks_per_slice, mask_batch):
    p = pl.program_id(0)          # TensorCore shard            ("parallel")
    k = pl.program_id(1)          # streaming / reduction step  ("arbitrary")
    bn, n_ch, hb, wb = x_ref.shape

    @pl.when(k == 0)
    def _():
        acc_ref[...] = jnp.zeros_like(acc_ref)

    # 2-D index grids / edge masks, hoisted out of the per-image loop.
    row = lax.broadcasted_iota(jnp.int32, (hb, wb), 0)
    col = lax.broadcasted_iota(jnp.int32, (hb, wb), 1)
    top, bot = row == 0, row == hb - 1
    lft, rgt = col == 0, col == wb - 1

    pad_spatial = (hb > valid_h) or (wb > valid_w)
    in_image = None
    if pad_spatial:
        in_image = jnp.logical_and(row < valid_h, col < valid_w)

    # First (logical, unclamped) image index covered by this block.
    base = (p * blocks_per_slice + k) * bn

    inv_c = 1.0 / n_ch
    step_sum = None
    for m in range(bn):                      # static unroll; bn is capped in the wrapper
        # Gray-scale difference mean_c(x) - mean_c(y), read channel-by-channel straight
        # from the VMEM block so the live vreg set stays at ~one (hb, wb) plane.
        d = x_ref[m, 0].astype(jnp.float32) - y_ref[m, 0].astype(jnp.float32)
        for c in range(1, n_ch):
            d += x_ref[m, c].astype(jnp.float32) - y_ref[m, c].astype(jnp.float32)
        d *= inv_c

        if pad_spatial:
            # Zero the padded region so garbage never reaches a valid tap.
            d = jnp.where(in_image, d, 0.0)

        # Separable Sobel (== F.conv2d(d, kernel_x/kernel_y, padding=1)).
        a = _shifted(d, 0, -1, top) + 2.0 * d + _shifted(d, 0, +1, bot)
        b = _shifted(d, 1, -1, lft) + 2.0 * d + _shifted(d, 1, +1, rgt)
        sx = _shifted(a, 1, +1, rgt) - _shifted(a, 1, -1, lft)
        sy = _shifted(b, 0, +1, bot) - _shifted(b, 0, -1, top)

        contrib = jnp.abs(sx) + jnp.abs(sy)
        if pad_spatial and mask_batch:
            keep = jnp.logical_and(in_image, base + m < n_images)
        elif pad_spatial:
            keep = in_image
        elif mask_batch:
            keep = base + m < n_images
        else:
            keep = None
        if keep is not None:
            contrib = jnp.where(keep, contrib, 0.0)

        step_sum = contrib if step_sum is None else step_sum + contrib

    # Single (hb, wb) accumulator read-modify-write per grid step.
    acc_ref[...] += step_sum

    # Finalize once per TensorCore shard: full reduce + normalization.
    @pl.when(k == pl.num_programs(1) - 1)
    def _():
        out_ref[0] = jnp.sum(acc_ref[...], keepdims=True) * inv_n


def gradient_loss(x, y, *, target_block_bytes=8 * 1024 * 1024,
                  max_images_per_step=16):
    """Pallas TPU implementation of GradientLoss.forward(x, y). Returns a scalar."""
    assert x.ndim == 4, x.shape
    assert y.shape == x.shape, (x.shape, y.shape)
    n, c, h, w = x.shape

    # Pad the plane (block spec only, no data movement) up to the native f32 tile so
    # every roll / store in the kernel is (8, 128)-aligned; padded rows/cols are masked.
    hb = _round_up(h, 8)
    wb = _round_up(w, 128)
    # TODO(synk): tile H (with a 1-row halo) once a single (c, hb, wb) plane no longer
    #             fits the per-step VMEM budget (e.g. full-HD inputs).

    itemsize = jnp.dtype(x.dtype).itemsize
    per_image_bytes = c * hb * wb * itemsize        # one image, one input, one buffer
    plane_f32 = hb * wb * 4

    vmem_cap = _vmem_capacity_bytes()               # generation-aware (64 MiB on v7x)
    budget = int(0.70 * vmem_cap)                   # leave headroom for temporaries
    fixed = 13 * plane_f32 + (2 << 20)              # acc + live Sobel temporaries + slack

    bn_vmem = max(1, (budget - fixed) // (4 * per_image_bytes))   # 2 inputs x 2 buffers
    bn_tgt = max(1, target_block_bytes // per_image_bytes)
    # TODO(synk): lift the unroll cap (fold extra batch into sublanes / fori_loop) to
    #             reach the full block-size target for very small images.
    bn = int(max(1, min(n, bn_tgt, bn_vmem, max_images_per_step)))

    nb = pl.cdiv(n, bn)                 # image blocks (tail handled by masking)
    p_slices = 2 if nb >= 2 else 1      # use both TensorCores where present (v7x)
    k_steps = pl.cdiv(nb, p_slices)
    mask_batch = (p_slices * k_steps * bn) != n

    inv_n = 1.0 / float(n * h * w)      # both loss terms share this denominator

    kernel = functools.partial(
        _gradient_loss_kernel,
        n_images=n, valid_h=h, valid_w=w, inv_n=inv_n,
        blocks_per_slice=k_steps, mask_batch=mask_batch)

    if p_slices * k_steps == nb:
        def in_map(pi, ki):
            return (pi * k_steps + ki, 0, 0, 0)
    else:
        def in_map(pi, ki):
            # Clamp so an odd split never requests a fully out-of-range block; the
            # duplicated images are discarded by the in-kernel batch mask.
            return (jnp.minimum(pi * k_steps + ki, nb - 1), 0, 0, 0)

    vmem_limit = 4 * bn * per_image_bytes + fixed + (8 << 20)
    vmem_limit = int(min(max(vmem_limit, 32 << 20), int(0.9 * vmem_cap)))

    partial_sums = pl.pallas_call(
        kernel,
        out_shape=jax.ShapeDtypeStruct((p_slices, 1, 1), jnp.float32),
        grid_spec=pltpu.PrefetchScalarGridSpec(
            num_scalar_prefetch=0,
            grid=(p_slices, k_steps),
            in_specs=[
                pl.BlockSpec((bn, c, hb, wb), in_map),
                pl.BlockSpec((bn, c, hb, wb), in_map),
            ],
            out_specs=pl.BlockSpec((1, 1, 1), lambda pi, ki: (pi, 0, 0)),
            scratch_shapes=[pltpu.VMEM((hb, wb), jnp.float32)],   # running |Sx|+|Sy| sums
        ),
        compiler_params=pltpu.CompilerParams(
            dimension_semantics=("parallel", "arbitrary"),
            vmem_limit_bytes=vmem_limit,
        ),
    )(x, y)
    return jnp.sum(partial_sums)


def gradient_loss_ref(x, y):
    """Pure-JAX reference mirroring the PyTorch module."""
    kx = jnp.array([[-1., 0., 1.], [-2., 0., 2.], [-1., 0., 1.]], dtype=jnp.float32)
    ky = jnp.array([[-1., -2., -1.], [0., 0., 0.], [1., 2., 1.]], dtype=jnp.float32)
    xg = jnp.mean(x.astype(jnp.float32), axis=1, keepdims=True)
    yg = jnp.mean(y.astype(jnp.float32), axis=1, keepdims=True)

    def conv(img, k):
        return lax.conv_general_dilated(
            img, k.reshape(1, 1, 3, 3), window_strides=(1, 1),
            padding=((1, 1), (1, 1)),
            dimension_numbers=("NCHW", "OIHW", "NCHW"))

    loss_x = jnp.mean(jnp.abs(conv(xg, kx) - conv(yg, kx)))
    loss_y = jnp.mean(jnp.abs(conv(xg, ky) - conv(yg, ky)))
    return loss_x + loss_y


if __name__ == "__main__":
    key = jax.random.PRNGKey(0)
    kx_key, ky_key = jax.random.split(key)
    # W = 128 keeps the demo on the fully lane-aligned path; other widths are handled
    # via the padded block spec + in-kernel masks.
    shape = (2, 4, 16, 128)
    x = jax.random.uniform(kx_key, shape, dtype=jnp.float32)
    y = jax.random.uniform(ky_key, shape, dtype=jnp.float32)

    loss = jax.block_until_ready(gradient_loss(x, y))
    ref = gradient_loss_ref(x, y)
    assert jnp.allclose(loss, ref, rtol=1e-4, atol=1e-6), (loss, ref)
    print("KERNEL_OK")
</pallas_src>

<mosaic_0001>
module attributes {stable_mosaic.version = 11 : i64} {
  func.func @_gradient_loss_kernel(%arg0: i32, %arg1: i32, %arg2: memref<2x4x16x128xf32, #tpu.memory_space<vmem>>, %arg3: memref<2x4x16x128xf32, #tpu.memory_space<vmem>>, %arg4: memref<1x1x1xf32, #tpu.memory_space<vmem>>, %arg5: memref<16x128xf32, #tpu.memory_space<vmem>>) attributes {dimension_semantics = [#tpu.dimension_semantics<parallel>, #tpu.dimension_semantics<arbitrary>], iteration_bounds = array<i64: 1, 1>, scalar_prefetch = 0 : i64, scratch_operands = 1 : i64, tpu.core_type = #tpu.core_type<tc>, window_params = [{transform_indices = @transform_0, window_bounds = array<i64: 2, 4, 16, 128>}, {transform_indices = @transform_1, window_bounds = array<i64: 2, 4, 16, 128>}, {transform_indices = @transform_2, window_bounds = array<i64: 1, 1, 1>}]} {
    %c0_i32 = arith.constant 0 : i32
    %0 = arith.cmpi eq, %arg1, %c0_i32 : i32
    %1 = arith.extui %0 : i1 to i32
    %c0_i32_0 = arith.constant 0 : i32
    %2 = arith.cmpi ne, %1, %c0_i32_0 : i32
    scf.if %2 {
      %cst_105 = arith.constant 0.000000e+00 : f32
      %144 = vector.broadcast %cst_105 : f32 to vector<16x128xf32>
      %c0_106 = arith.constant 0 : index
      %c0_107 = arith.constant 0 : index
      %145 = vector.load %arg5[%c0_106, %c0_107] : memref<16x128xf32, #tpu.memory_space<vmem>>, vector<16x128xf32>
      tpu.vector_store %arg5[%c0_106, %c0_107], %144 {strides = array<i32>} : memref<16x128xf32, #tpu.memory_space<vmem>>, vector<16x128xf32>,
    } else {
    }
    %3 = tpu.iota {dimensions = array<i32: 0>} : vector<16x128xi32>
    %4 = tpu.iota {dimensions = array<i32: 1>} : vector<16x128xi32>
    %c0_i32_1 = arith.constant 0 : i32
    %5 = vector.broadcast %c0_i32_1 : i32 to vector<16x128xi32>
    %6 = arith.cmpi eq, %3, %5 : vector<16x128xi32>
    %c15_i32 = arith.constant 15 : i32
    %7 = vector.broadcast %c15_i32 : i32 to vector<16x128xi32>
    %8 = arith.cmpi eq, %3, %7 : vector<16x128xi32>
    %c0_i32_2 = arith.constant 0 : i32
    %9 = vector.broadcast %c0_i32_2 : i32 to vector<16x128xi32>
    %10 = arith.cmpi eq, %4, %9 : vector<16x128xi32>
    %c127_i32 = arith.constant 127 : i32
    %11 = vector.broadcast %c127_i32 : i32 to vector<16x128xi32>
    %12 = arith.cmpi eq, %4, %11 : vector<16x128xi32>
    %c0 = arith.constant 0 : index
    %c0_3 = arith.constant 0 : index
    %c0_4 = arith.constant 0 : index
    %c0_5 = arith.constant 0 : index
    %13 = vector.load %arg2[%c0, %c0_3, %c0_4, %c0_5] : memref<2x4x16x128xf32, #tpu.memory_space<vmem>>, vector<1x1x16x128xf32>
    %14 = vector.shape_cast %13 : vector<1x1x16x128xf32> to vector<16x128xf32>
    %c0_6 = arith.constant 0 : index
    %c0_7 = arith.constant 0 : index
    %c0_8 = arith.constant 0 : index
    %c0_9 = arith.constant 0 : index
    %15 = vector.load %arg3[%c0_6, %c0_7, %c0_8, %c0_9] : memref<2x4x16x128xf32, #tpu.memory_space<vmem>>, vector<1x1x16x128xf32>
    %16 = vector.shape_cast %15 : vector<1x1x16x128xf32> to vector<16x128xf32>
    %17 = arith.subf %14, %16 : vector<16x128xf32>
    %c0_10 = arith.constant 0 : index
    %c1 = arith.constant 1 : index
    %c0_11 = arith.constant 0 : index
    %c0_12 = arith.constant 0 : index
    %18 = vector.load %arg2[%c0_10, %c1, %c0_11, %c0_12] : memref<2x4x16x128xf32, #tpu.memory_space<vmem>>, vector<1x1x16x128xf32>
    %19 = vector.shape_cast %18 : vector<1x1x16x128xf32> to vector<16x128xf32>
    %c0_13 = arith.constant 0 : index
    %c1_14 = arith.constant 1 : index
    %c0_15 = arith.constant 0 : index
    %c0_16 = arith.constant 0 : index
    %20 = vector.load %arg3[%c0_13, %c1_14, %c0_15, %c0_16] : memref<2x4x16x128xf32, #tpu.memory_space<vmem>>, vector<1x1x16x128xf32>
    %21 = vector.shape_cast %20 : vector<1x1x16x128xf32> to vector<16x128xf32>
    %22 = arith.subf %19, %21 : vector<16x128xf32>
    %23 = arith.addf %17, %22 : vector<16x128xf32>
    %c0_17 = arith.constant 0 : index
    %c2 = arith.constant 2 : index
    %c0_18 = arith.constant 0 : index
    %c0_19 = arith.constant 0 : index
    %24 = vector.load %arg2[%c0_17, %c2, %c0_18, %c0_19] : memref<2x4x16x128xf32, #tpu.memory_space<vmem>>, vector<1x1x16x128xf32>
    %25 = vector.shape_cast %24 : vector<1x1x16x128xf32> to vector<16x128xf32>
    %c0_20 = arith.constant 0 : index
    %c2_21 = arith.constant 2 : index
    %c0_22 = arith.constant 0 : index
    %c0_23 = arith.constant 0 : index
    %26 = vector.load %arg3[%c0_20, %c2_21, %c0_22, %c0_23] : memref<2x4x16x128xf32, #tpu.memory_space<vmem>>, vector<1x1x16x128xf32>
    %27 = vector.shape_cast %26 : vector<1x1x16x128xf32> to vector<16x128xf32>
    %28 = arith.subf %25, %27 : vector<16x128xf32>
    %29 = arith.addf %23, %28 : vector<16x128xf32>
    %c0_24 = arith.constant 0 : index
    %c3 = arith.constant 3 : index
    %c0_25 = arith.constant 0 : index
    %c0_26 = arith.constant 0 : index
    %30 = vector.load %arg2[%c0_24, %c3, %c0_25, %c0_26] : memref<2x4x16x128xf32, #tpu.memory_space<vmem>>, vector<1x1x16x128xf32>
    %31 = vector.shape_cast %30 : vector<1x1x16x128xf32> to vector<16x128xf32>
    %c0_27 = arith.constant 0 : index
    %c3_28 = arith.constant 3 : index
    %c0_29 = arith.constant 0 : index
    %c0_30 = arith.constant 0 : index
    %32 = vector.load %arg3[%c0_27, %c3_28, %c0_29, %c0_30] : memref<2x4x16x128xf32, #tpu.memory_space<vmem>>, vector<1x1x16x128xf32>
    %33 = vector.shape_cast %32 : vector<1x1x16x128xf32> to vector<16x128xf32>
    %34 = arith.subf %31, %33 : vector<16x128xf32>
    %35 = arith.addf %29, %34 : vector<16x128xf32>
    %cst = arith.constant 2.500000e-01 : f32
    %36 = vector.broadcast %cst : f32 to vector<16x128xf32>
    %37 = arith.mulf %35, %36 : vector<16x128xf32>
    %c1_i32 = arith.constant 1 : i32
    %38 = tpu.dynamic_rotate %37 by %c1_i32 dim 0 : vector<16x128xf32>, i32 -> vector<16x128xf32>
    %cst_31 = arith.constant 0.000000e+00 : f32
    %39 = vector.broadcast %cst_31 : f32 to vector<16x128xf32>
    %40 = arith.select %6, %39, %38 : vector<16x128xi1>, vector<16x128xf32>
    %cst_32 = arith.constant 2.000000e+00 : f32
    %41 = vector.broadcast %cst_32 : f32 to vector<16x128xf32>
    %42 = arith.mulf %41, %37 : vector<16x128xf32>
    %43 = arith.addf %40, %42 : vector<16x128xf32>
    %c15_i32_33 = arith.constant 15 : i32
    %44 = tpu.dynamic_rotate %37 by %c15_i32_33 dim 0 : vector<16x128xf32>, i32 -> vector<16x128xf32>
    %cst_34 = arith.constant 0.000000e+00 : f32
    %45 = vector.broadcast %cst_34 : f32 to vector<16x128xf32>
    %46 = arith.select %8, %45, %44 : vector<16x128xi1>, vector<16x128xf32>
    %47 = arith.addf %43, %46 : vector<16x128xf32>
    %c1_i32_35 = arith.constant 1 : i32
    %48 = tpu.dynamic_rotate %37 by %c1_i32_35 dim 1 : vector<16x128xf32>, i32 -> vector<16x128xf32>
    %cst_36 = arith.constant 0.000000e+00 : f32
    %49 = vector.broadcast %cst_36 : f32 to vector<16x128xf32>
    %50 = arith.select %10, %49, %48 : vector<16x128xi1>, vector<16x128xf32>
    %cst_37 = arith.constant 2.000000e+00 : f32
    %51 = vector.broadcast %cst_37 : f32 to vector<16x128xf32>
    %52 = arith.mulf %51, %37 : vector<16x128xf32>
    %53 = arith.addf %50, %52 : vector<16x128xf32>
    %c127_i32_38 = arith.constant 127 : i32
    %54 = tpu.dynamic_rotate %37 by %c127_i32_38 dim 1 : vector<16x128xf32>, i32 -> vector<16x128xf32>
    %cst_39 = arith.constant 0.000000e+00 : f32
    %55 = vector.broadcast %cst_39 : f32 to vector<16x128xf32>
    %56 = arith.select %12, %55, %54 : vector<16x128xi1>, vector<16x128xf32>
    %57 = arith.addf %53, %56 : vector<16x128xf32>
    %c127_i32_40 = arith.constant 127 : i32
    %58 = tpu.dynamic_rotate %47 by %c127_i32_40 dim 1 : vector<16x128xf32>, i32 -> vector<16x128xf32>
    %cst_41 = arith.constant 0.000000e+00 : f32
    %59 = vector.broadcast %cst_41 : f32 to vector<16x128xf32>
    %60 = arith.select %12, %59, %58 : vector<16x128xi1>, vector<16x128xf32>
    %c1_i32_42 = arith.constant 1 : i32
    %61 = tpu.dynamic_rotate %47 by %c1_i32_42 dim 1 : vector<16x128xf32>, i32 -> vector<16x128xf32>
    %cst_43 = arith.constant 0.000000e+00 : f32
    %62 = vector.broadcast %cst_43 : f32 to vector<16x128xf32>
    %63 = arith.select %10, %62, %61 : vector<16x128xi1>, vector<16x128xf32>
    %64 = arith.subf %60, %63 : vector<16x128xf32>
    %c15_i32_44 = arith.constant 15 : i32
    %65 = tpu.dynamic_rotate %57 by %c15_i32_44 dim 0 : vector<16x128xf32>, i32 -> vector<16x128xf32>
    %cst_45 = arith.constant 0.000000e+00 : f32
    %66 = vector.broadcast %cst_45 : f32 to vector<16x128xf32>
    %67 = arith.select %8, %66, %65 : vector<16x128xi1>, vector<16x128xf32>
    %c1_i32_46 = arith.constant 1 : i32
    %68 = tpu.dynamic_rotate %57 by %c1_i32_46 dim 0 : vector<16x128xf32>, i32 -> vector<16x128xf32>
    %cst_47 = arith.constant 0.000000e+00 : f32
    %69 = vector.broadcast %cst_47 : f32 to vector<16x128xf32>
    %70 = arith.select %6, %69, %68 : vector<16x128xi1>, vector<16x128xf32>
    %71 = arith.subf %67, %70 : vector<16x128xf32>
    %72 = math.absf %64 : vector<16x128xf32>
    %73 = math.absf %71 : vector<16x128xf32>
    %74 = arith.addf %72, %73 : vector<16x128xf32>
    %c1_48 = arith.constant 1 : index
    %c0_49 = arith.constant 0 : index
    %c0_50 = arith.constant 0 : index
    %c0_51 = arith.constant 0 : index
    %75 = vector.load %arg2[%c1_48, %c0_49, %c0_50, %c0_51] : memref<2x4x16x128xf32, #tpu.memory_space<vmem>>, vector<1x1x16x128xf32>
    %76 = vector.shape_cast %75 : vector<1x1x16x128xf32> to vector<16x128xf32>
    %c1_52 = arith.constant 1 : index
    %c0_53 = arith.constant 0 : index
    %c0_54 = arith.constant 0 : index
    %c0_55 = arith.constant 0 : index
    %77 = vector.load %arg3[%c1_52, %c0_53, %c0_54, %c0_55] : memref<2x4x16x128xf32, #tpu.memory_space<vmem>>, vector<1x1x16x128xf32>
    %78 = vector.shape_cast %77 : vector<1x1x16x128xf32> to vector<16x128xf32>
    %79 = arith.subf %76, %78 : vector<16x128xf32>
    %c1_56 = arith.constant 1 : index
    %c1_57 = arith.constant 1 : index
    %c0_58 = arith.constant 0 : index
    %c0_59 = arith.constant 0 : index
    %80 = vector.load %arg2[%c1_56, %c1_57, %c0_58, %c0_59] : memref<2x4x16x128xf32, #tpu.memory_space<vmem>>, vector<1x1x16x128xf32>
    %81 = vector.shape_cast %80 : vector<1x1x16x128xf32> to vector<16x128xf32>
    %c1_60 = arith.constant 1 : index
    %c1_61 = arith.constant 1 : index
    %c0_62 = arith.constant 0 : index
    %c0_63 = arith.constant 0 : index
    %82 = vector.load %arg3[%c1_60, %c1_61, %c0_62, %c0_63] : memref<2x4x16x128xf32, #tpu.memory_space<vmem>>, vector<1x1x16x128xf32>
    %83 = vector.shape_cast %82 : vector<1x1x16x128xf32> to vector<16x128xf32>
    %84 = arith.subf %81, %83 : vector<16x128xf32>
    %85 = arith.addf %79, %84 : vector<16x128xf32>
    %c1_64 = arith.constant 1 : index
    %c2_65 = arith.constant 2 : index
    %c0_66 = arith.constant 0 : index
    %c0_67 = arith.constant 0 : index
    %86 = vector.load %arg2[%c1_64, %c2_65, %c0_66, %c0_67] : memref<2x4x16x128xf32, #tpu.memory_space<vmem>>, vector<1x1x16x128xf32>
    %87 = vector.shape_cast %86 : vector<1x1x16x128xf32> to vector<16x128xf32>
    %c1_68 = arith.constant 1 : index
    %c2_69 = arith.constant 2 : index
    %c0_70 = arith.constant 0 : index
    %c0_71 = arith.constant 0 : index
    %88 = vector.load %arg3[%c1_68, %c2_69, %c0_70, %c0_71] : memref<2x4x16x128xf32, #tpu.memory_space<vmem>>, vector<1x1x16x128xf32>
    %89 = vector.shape_cast %88 : vector<1x1x16x128xf32> to vector<16x128xf32>
    %90 = arith.subf %87, %89 : vector<16x128xf32>
    %91 = arith.addf %85, %90 : vector<16x128xf32>
    %c1_72 = arith.constant 1 : index
    %c3_73 = arith.constant 3 : index
    %c0_74 = arith.constant 0 : index
    %c0_75 = arith.constant 0 : index
    %92 = vector.load %arg2[%c1_72, %c3_73, %c0_74, %c0_75] : memref<2x4x16x128xf32, #tpu.memory_space<vmem>>, vector<1x1x16x128xf32>
    %93 = vector.shape_cast %92 : vector<1x1x16x128xf32> to vector<16x128xf32>
    %c1_76 = arith.constant 1 : index
    %c3_77 = arith.constant 3 : index
    %c0_78 = arith.constant 0 : index
    %c0_79 = arith.constant 0 : index
    %94 = vector.load %arg3[%c1_76, %c3_77, %c0_78, %c0_79] : memref<2x4x16x128xf32, #tpu.memory_space<vmem>>, vector<1x1x16x128xf32>
    %95 = vector.shape_cast %94 : vector<1x1x16x128xf32> to vector<16x128xf32>
    %96 = arith.subf %93, %95 : vector<16x128xf32>
    %97 = arith.addf %91, %96 : vector<16x128xf32>
    %cst_80 = arith.constant 2.500000e-01 : f32
    %98 = vector.broadcast %cst_80 : f32 to vector<16x128xf32>
    %99 = arith.mulf %97, %98 : vector<16x128xf32>
    %c1_i32_81 = arith.constant 1 : i32
    %100 = tpu.dynamic_rotate %99 by %c1_i32_81 dim 0 : vector<16x128xf32>, i32 -> vector<16x128xf32>
    %cst_82 = arith.constant 0.000000e+00 : f32
    %101 = vector.broadcast %cst_82 : f32 to vector<16x128xf32>
    %102 = arith.select %6, %101, %100 : vector<16x128xi1>, vector<16x128xf32>
    %cst_83 = arith.constant 2.000000e+00 : f32
    %103 = vector.broadcast %cst_83 : f32 to vector<16x128xf32>
    %104 = arith.mulf %103, %99 : vector<16x128xf32>
    %105 = arith.addf %102, %104 : vector<16x128xf32>
    %c15_i32_84 = arith.constant 15 : i32
    %106 = tpu.dynamic_rotate %99 by %c15_i32_84 dim 0 : vector<16x128xf32>, i32 -> vector<16x128xf32>
    %cst_85 = arith.constant 0.000000e+00 : f32
    %107 = vector.broadcast %cst_85 : f32 to vector<16x128xf32>
    %108 = arith.select %8, %107, %106 : vector<16x128xi1>, vector<16x128xf32>
    %109 = arith.addf %105, %108 : vector<16x128xf32>
    %c1_i32_86 = arith.constant 1 : i32
    %110 = tpu.dynamic_rotate %99 by %c1_i32_86 dim 1 : vector<16x128xf32>, i32 -> vector<16x128xf32>
    %cst_87 = arith.constant 0.000000e+00 : f32
    %111 = vector.broadcast %cst_87 : f32 to vector<16x128xf32>
    %112 = arith.select %10, %111, %110 : vector<16x128xi1>, vector<16x128xf32>
    %cst_88 = arith.constant 2.000000e+00 : f32
    %113 = vector.broadcast %cst_88 : f32 to vector<16x128xf32>
    %114 = arith.mulf %113, %99 : vector<16x128xf32>
    %115 = arith.addf %112, %114 : vector<16x128xf32>
    %c127_i32_89 = arith.constant 127 : i32
    %116 = tpu.dynamic_rotate %99 by %c127_i32_89 dim 1 : vector<16x128xf32>, i32 -> vector<16x128xf32>
    %cst_90 = arith.constant 0.000000e+00 : f32
    %117 = vector.broadcast %cst_90 : f32 to vector<16x128xf32>
    %118 = arith.select %12, %117, %116 : vector<16x128xi1>, vector<16x128xf32>
    %119 = arith.addf %115, %118 : vector<16x128xf32>
    %c127_i32_91 = arith.constant 127 : i32
    %120 = tpu.dynamic_rotate %109 by %c127_i32_91 dim 1 : vector<16x128xf32>, i32 -> vector<16x128xf32>
    %cst_92 = arith.constant 0.000000e+00 : f32
    %121 = vector.broadcast %cst_92 : f32 to vector<16x128xf32>
    %122 = arith.select %12, %121, %120 : vector<16x128xi1>, vector<16x128xf32>
    %c1_i32_93 = arith.constant 1 : i32
    %123 = tpu.dynamic_rotate %109 by %c1_i32_93 dim 1 : vector<16x128xf32>, i32 -> vector<16x128xf32>
    %cst_94 = arith.constant 0.000000e+00 : f32
    %124 = vector.broadcast %cst_94 : f32 to vector<16x128xf32>
    %125 = arith.select %10, %124, %123 : vector<16x128xi1>, vector<16x128xf32>
    %126 = arith.subf %122, %125 : vector<16x128xf32>
    %c15_i32_95 = arith.constant 15 : i32
    %127 = tpu.dynamic_rotate %119 by %c15_i32_95 dim 0 : vector<16x128xf32>, i32 -> vector<16x128xf32>
    %cst_96 = arith.constant 0.000000e+00 : f32
    %128 = vector.broadcast %cst_96 : f32 to vector<16x128xf32>
    %129 = arith.select %8, %128, %127 : vector<16x128xi1>, vector<16x128xf32>
    %c1_i32_97 = arith.constant 1 : i32
    %130 = tpu.dynamic_rotate %119 by %c1_i32_97 dim 0 : vector<16x128xf32>, i32 -> vector<16x128xf32>
    %cst_98 = arith.constant 0.000000e+00 : f32
    %131 = vector.broadcast %cst_98 : f32 to vector<16x128xf32>
    %132 = arith.select %6, %131, %130 : vector<16x128xi1>, vector<16x128xf32>
    %133 = arith.subf %129, %132 : vector<16x128xf32>
    %134 = math.absf %126 : vector<16x128xf32>
    %135 = math.absf %133 : vector<16x128xf32>
    %136 = arith.addf %134, %135 : vector<16x128xf32>
    %137 = arith.addf %74, %136 : vector<16x128xf32>
    %c0_99 = arith.constant 0 : index
    %c0_100 = arith.constant 0 : index
    %138 = vector.load %arg5[%c0_99, %c0_100] : memref<16x128xf32, #tpu.memory_space<vmem>>, vector<16x128xf32>
    %139 = arith.addf %138, %137 : vector<16x128xf32>
    %c0_101 = arith.constant 0 : index
    %c0_102 = arith.constant 0 : index
    %140 = vector.load %arg5[%c0_101, %c0_102] : memref<16x128xf32, #tpu.memory_space<vmem>>, vector<16x128xf32>
    tpu.vector_store %arg5[%c0_101, %c0_102], %139 {strides = array<i32>} : memref<16x128xf32, #tpu.memory_space<vmem>>, vector<16x128xf32>,
    %c0_i32_103 = arith.constant 0 : i32
    %141 = arith.cmpi eq, %arg1, %c0_i32_103 : i32
    %142 = arith.extui %141 : i1 to i32
    %c0_i32_104 = arith.constant 0 : i32
    %143 = arith.cmpi ne, %142, %c0_i32_104 : i32
    scf.if %143 {
      %c0_105 = arith.constant 0 : index
      %c0_106 = arith.constant 0 : index
      %144 = vector.load %arg5[%c0_105, %c0_106] : memref<16x128xf32, #tpu.memory_space<vmem>>, vector<16x128xf32>
      %145 = vector.shape_cast %144 : vector<16x128xf32> to vector<1x16x128xf32>
      %cst_107 = arith.constant dense<0.000000e+00> : vector<1xf32>
      %146 = vector.multi_reduction <add>, %145, %cst_107 [1, 2] : vector<1x16x128xf32> to vector<1xf32>
      %147 = vector.shape_cast %146 : vector<1xf32> to vector<1x1x1xf32>
      %148 = vector.extract %147[0, 0, 0] : f32 from vector<1x1x1xf32>
      %149 = vector.broadcast %148 : f32 to vector<1x1xf32>
      %cst_108 = arith.constant 2.44140625E-4 : f32
      %150 = vector.broadcast %cst_108 : f32 to vector<1x1xf32>
      %151 = arith.mulf %149, %150 : vector<1x1xf32>
      %c0_109 = arith.constant 0 : index
      %c0_110 = arith.constant 0 : index
      %c0_111 = arith.constant 0 : index
      %152 = vector.load %arg4[%c0_109, %c0_110, %c0_111] : memref<1x1x1xf32, #tpu.memory_space<vmem>>, vector<1x1x1xf32>
      %153 = vector.shape_cast %152 : vector<1x1x1xf32> to vector<1x1xf32>
      %154 = vector.shape_cast %151 : vector<1x1xf32> to vector<1x1x1xf32>
      tpu.vector_store %arg4[%c0_109, %c0_110, %c0_111], %154 {strides = array<i32>} : memref<1x1x1xf32, #tpu.memory_space<vmem>>, vector<1x1x1xf32>,
    } else {
    }
    return
  }
  func.func @transform_0(%arg0: i32, %arg1: i32) -> (i32, i32, i32, i32) {
    %c1_i32 = arith.constant 1 : i32
    %0 = arith.muli %arg0, %c1_i32 : i32
    %1 = arith.addi %0, %arg1 : i32
    %c0_i32 = arith.constant 0 : i32
    %c0_i32_0 = arith.constant 0 : i32
    %c0_i32_1 = arith.constant 0 : i32
    %c0_i32_2 = arith.constant 0 : i32
    return %1, %c0_i32, %c0_i32_0, %c0_i32_1 : i32, i32, i32, i32
  }
  func.func @transform_1(%arg0: i32, %arg1: i32) -> (i32, i32, i32, i32) {
    %c1_i32 = arith.constant 1 : i32
    %0 = arith.muli %arg0, %c1_i32 : i32
    %1 = arith.addi %0, %arg1 : i32
    %c0_i32 = arith.constant 0 : i32
    %c0_i32_0 = arith.constant 0 : i32
    %c0_i32_1 = arith.constant 0 : i32
    %c0_i32_2 = arith.constant 0 : i32
    return %1, %c0_i32, %c0_i32_0, %c0_i32_1 : i32, i32, i32, i32
  }
  func.func @transform_2(%arg0: i32, %arg1: i32) -> (i32, i32, i32) {
    %c0_i32 = arith.constant 0 : i32
    %c0_i32_0 = arith.constant 0 : i32
    %c0_i32_1 = arith.constant 0 : i32
    return %arg0, %c0_i32, %c0_i32_0 : i32, i32, i32
  }
}

</mosaic_0001>

<llo_original>
// kernel: tpu_custom_call.1
$region0: #{tpu_custom_call.1}
  #allocation0 [shape = 'u32[]', space=smem, size = 0x4, offset = 0x4, fixed_abs, tag = 'smem constant byte address 0x4 - core index']
  #allocation1 [shape = 'u32[144,128]{1,0:T(1,128)}', space=vmem, size = 0x12000, scoped, tag = 'internal scratch']
  #allocation2 [shape = 'f32[16,128]{1,0:T(8,128)}', space=vmem, size = 0x2000, scoped, tag = 'scratch operand']
  %s0 = inlined_call_operand.hbm [shape: f32[2,4,16,128], index: 0, kind: input, shape index: {}]
  %s1 = inlined_call_operand.hbm [shape: f32[2,4,16,128], index: 1, kind: input, shape index: {}]
  %s2 = inlined_call_operand.hbm [shape: f32[1,1,1], index: 2, kind: output, shape index: {}]
  %s3 = sld [smem:[#allocation0]]
  $region34: #{tpu_custom_call.1} parent=0
    _
  %s5 = ssub.s32 1, %s3
  %s6 = scalar_select 0, %s5, %s3
  $region1: #{tpu_custom_call.1} parent=0
    #allocation3 [shape = 'u8[65536]{0}', space=vmem, size = 0x10000, scoped, tag = 'input window, operand 0, single buffered']
    #allocation4 [shape = 's32[1]{0}', space=sflag, size = 0x4, scoped, tag = 'scoped memory for tpu_custom_call.1']
    #allocation5 [shape = 's32[1]{0}', space=sflag, size = 0x4, scoped, tag = 'scoped memory for tpu_custom_call.1']
    #allocation6 [shape = 'u8[65536]{0}', space=vmem, size = 0x10000, scoped, tag = 'input window, operand 1, single buffered']
    #allocation7 [shape = 's32[1]{0}', space=sflag, size = 0x4, scoped, tag = 'scoped memory for tpu_custom_call.1']
    #allocation8 [shape = 'u8[512]{0}', space=vmem, size = 0x400, scoped, tag = 'output window, operand 0, single buffered']
    %7 = vsyncpa [#allocation4], 0
    %8 = vsyncpa [#allocation7], 0
    %9 = vsyncpa [#allocation5], 0
    // Predicated region
    $region2: #{tpu_custom_call.1} parent=1 // pred_check
      _
    $region3: #{tpu_custom_call.1} parent=1 // pred_check_branch
      %11 = sbr.rel (0) target = $region5
    $region4: #{tpu_custom_call.1} parent=1 // pred_region
      %s12 = sadd.s32 0, 0
      %s13 = smul.u32 2, %s12
      %s15 = ssub.s32 2048, 2048
      %16 = vsyncadd [#allocation4], %s15
      %s17 = smul.addr %s13, 8
      %s18 = smul.addr %s17, 128
      %s19 = scalar_lea.hbm %s0, %s18
      %s20 = sshll.u32 [#allocation3], 4
      %s21 = int_to_ptr.vmem [resolvable:$true] %s20
      %26 = dma.hbm_to_vmem [thread:$0]  %s19, 2048, %s21, [#allocation4], 128, 128, 8
    $region5: #{tpu_custom_call.1} parent=1 // pred_fallthru
      _
    // Predicated region
    $region6: #{tpu_custom_call.1} parent=1 // pred_check
      _
    $region7: #{tpu_custom_call.1} parent=1 // pred_check_branch
      %28 = sbr.rel (0) target = $region9
    $region8: #{tpu_custom_call.1} parent=1 // pred_region
      %s29 = sadd.s32 0, 0
      %s30 = smul.u32 2, %s29
      %s32 = ssub.s32 2048, 2048
      %33 = vsyncadd [#allocation7], %s32
      %s34 = smul.addr %s30, 8
      %s35 = smul.addr %s34, 128
      %s36 = scalar_lea.hbm %s1, %s35
      %s37 = sshll.u32 [#allocation6], 4
      %s38 = int_to_ptr.vmem [resolvable:$true] %s37
      %43 = dma.hbm_to_vmem [thread:$0]  %s36, 2048, %s38, [#allocation7], 128, 128, 8
    $region9: #{tpu_custom_call.1} parent=1 // pred_fallthru
      _
    // Predicated region
    $region10: #{tpu_custom_call.1} parent=1 // pred_check
      _
    $region11: #{tpu_custom_call.1} parent=1 // pred_check_branch
      %45 = sbr.rel (0) target = $region13
    $region12: #{tpu_custom_call.1} parent=1 // pred_region
      %46 = dma.done [#allocation4], 2048
    $region13: #{tpu_custom_call.1} parent=1 // pred_fallthru
      _
    // Predicated region
    $region14: #{tpu_custom_call.1} parent=1 // pred_check
      _
    $region15: #{tpu_custom_call.1} parent=1 // pred_check_branch
      %48 = sbr.rel (0) target = $region17
    $region16: #{tpu_custom_call.1} parent=1 // pred_region
      %49 = dma.done [#allocation7], 2048
    $region17: #{tpu_custom_call.1} parent=1 // pred_fallthru
      _
    %s50 = sadd.s32 0, 0
    %s51 = smul.u32 2, %s50
    %s52 = sadd.s32 0, 0
    %s53 = smul.u32 2, %s52
    %p54 = scmp.eq.s32.totalorder 0, 0
    // Predicated region
    $region18: #{tpu_custom_call.1} parent=1 // pred_check
      %p55 = pneg %p54
    $region19: #{tpu_custom_call.1} parent=1 // pred_check_branch
      %57 = sbr.rel (%p55) target = $region21
    $region20: #{tpu_custom_call.1} parent=1 // pred_region
      %58 = vst [vmem:[#allocation2] sm:$0xff] 0.0
      %59 = vst [vmem:[#allocation2 + $0x8] sm:$0xff] 0.0
    $region21: #{tpu_custom_call.1} parent=1 // pred_fallthru
      _
    %v60 = vlaneseq
    %v61 = vshrl.u32 %v60, 7
    %v62 = vadd.s32 %v61, 8
    %v63 = vlaneseq
    %v64 = vand.u32 %v63, 127
    %vm65 = vcmp.eq.s32.totalorder %v61, 0
    %vm66 = vcmp.eq.s32.totalorder %v62, 0
    %vm67 = vcmp.eq.s32.totalorder %v61, 15
    %vm68 = vcmp.eq.s32.totalorder %v62, 15
    %vm69 = vcmp.eq.s32.totalorder %v64, 0
    %vm70 = vcmp.eq.s32.totalorder %v64, 127
    %v71 = vld [vmem:[#allocation3] sm:$0xff]
    %v72 = vld [vmem:[#allocation3 + $0x8] sm:$0xff]
    %v73 = vld [vmem:[#allocation6] sm:$0xff]
    %v74 = vld [vmem:[#allocation6 + $0x8] sm:$0xff]
    %v75 = vsub.f32 %v71, %v73
    %v76 = vsub.f32 %v72, %v74
    %s77 = scalar_lea.vmem [#allocation3], 16
    %v78 = vld [vmem:[%s77] sm:$0xff]
    %v79 = vld [vmem:[%s77 + $0x8] sm:$0xff]
    %s80 = scalar_lea.vmem [#allocation6], 16
    %v81 = vld [vmem:[%s80] sm:$0xff]
    %v82 = vld [vmem:[%s80 + $0x8] sm:$0xff]
    %v83 = vsub.f32 %v78, %v81
    %v84 = vsub.f32 %v79, %v82
    %v85 = vadd.f32 %v75, %v83
    %v86 = vadd.f32 %v76, %v84
    %s87 = scalar_lea.vmem [#allocation3], 32
    %v88 = vld [vmem:[%s87] sm:$0xff]
    %v89 = vld [vmem:[%s87 + $0x8] sm:$0xff]
    %s90 = scalar_lea.vmem [#allocation6], 32
    %v91 = vld [vmem:[%s90] sm:$0xff]
    %v92 = vld [vmem:[%s90 + $0x8] sm:$0xff]
    %v93 = vsub.f32 %v88, %v91
    %v94 = vsub.f32 %v89, %v92
    %v95 = vadd.f32 %v85, %v93
    %v96 = vadd.f32 %v86, %v94
    %s97 = scalar_lea.vmem [#allocation3], 48
    %v98 = vld [vmem:[%s97] sm:$0xff]
    %v99 = vld [vmem:[%s97 + $0x8] sm:$0xff]
    %s100 = scalar_lea.vmem [#allocation6], 48
    %v101 = vld [vmem:[%s100] sm:$0xff]
    %v102 = vld [vmem:[%s100 + $0x8] sm:$0xff]
    %v103 = vsub.f32 %v98, %v101
    %v104 = vsub.f32 %v99, %v102
    %v105 = vadd.f32 %v95, %v103
    %v106 = vadd.f32 %v96, %v104
    %v107 = vmul.f32 %v105, 0.25
    %v108 = vmul.f32 %v106, 0.25
    %v109 = vrot.slane %v107, 7
    %v110 = vrot.slane %v108, 7
    %vm111 = vcmp.lt.s32.totalorder %v61, 1
    %v112 = vsel %vm111, %v109, %v110
    %v113 = vsel %vm111, %v110, %v109
    %v114 = vsel %vm65, 0.0, %v113
    %v115 = vsel %vm66, 0.0, %v112
    %v116 = vmul.f32 %v107, 2.0
    %v117 = vmul.f32 %v108, 2.0
    %v118 = vadd.f32 %v114, %v116
    %v119 = vadd.f32 %v115, %v117
    %v120 = vrot.slane %v107, 1
    %v121 = vrot.slane %v108, 1
    %vm122 = vcmp.lt.s32.totalorder %v61, 7
    %v123 = vsel %vm122, %v120, %v121
    %v124 = vsel %vm122, %v121, %v120
    %v125 = vsel %vm67, 0.0, %v123
    %v126 = vsel %vm68, 0.0, %v124
    %v127 = vadd.f32 %v118, %v125
    %v128 = vadd.f32 %v119, %v126
    %129 = vrot.lane.b32.xlu0 %v107, 1
    %v130 = vpop.permute.xlu0 %129
    %131 = vrot.lane.b32.xlu0 %v108, 1
    %v132 = vpop.permute.xlu0 %131
    %v133 = vsel %vm69, 0.0, %v130
    %v134 = vsel %vm69, 0.0, %v132
    %v135 = vadd.f32 %v133, %v116
    %v136 = vadd.f32 %v134, %v117
    %137 = vrot.lane.b32.xlu0 %v107, 127
    %v138 = vpop.permute.xlu0 %137
    %139 = vrot.lane.b32.xlu0 %v108, 127
    %v140 = vpop.permute.xlu0 %139
    %v141 = vsel %vm70, 0.0, %v138
    %v142 = vsel %vm70, 0.0, %v140
    %v143 = vadd.f32 %v135, %v141
    %v144 = vadd.f32 %v136, %v142
    %145 = vrot.lane.b32.xlu0 %v127, 127
    %v146 = vpop.permute.xlu0 %145
    %147 = vrot.lane.b32.xlu0 %v128, 127
    %v148 = vpop.permute.xlu0 %147
    %v149 = vsel %vm70, 0.0, %v146
    %v150 = vsel %vm70, 0.0, %v148
    %151 = vrot.lane.b32.xlu0 %v127, 1
    %v152 = vpop.permute.xlu0 %151
    %153 = vrot.lane.b32.xlu0 %v128, 1
    %v154 = vpop.permute.xlu0 %153
    %v155 = vsel %vm69, 0.0, %v152
    %v156 = vsel %vm69, 0.0, %v154
    %v157 = vsub.f32 %v149, %v155
    %v158 = vsub.f32 %v150, %v156
    %v159 = vrot.slane %v143, 1
    %v160 = vrot.slane %v144, 1
    %v161 = vsel %vm122, %v159, %v160
    %v162 = vsel %vm122, %v160, %v159
    %v163 = vsel %vm67, 0.0, %v161
    %v164 = vsel %vm68, 0.0, %v162
    %v165 = vrot.slane %v143, 7
    %v166 = vrot.slane %v144, 7
    %v167 = vsel %vm111, %v165, %v166
    %v168 = vsel %vm111, %v166, %v165
    %v169 = vsel %vm65, 0.0, %v168
    %v170 = vsel %vm66, 0.0, %v167
    %v171 = vsub.f32 %v163, %v169
    %v172 = vsub.f32 %v164, %v170
    %v173 = vand.u32 2147483647, %v157
    %v174 = vand.u32 2147483647, %v158
    %v175 = vand.u32 2147483647, %v171
    %v176 = vand.u32 2147483647, %v172
    %v177 = vadd.f32 %v173, %v175
    %v178 = vadd.f32 %v174, %v176
    %s179 = scalar_lea.vmem [#allocation3], 64
    %v180 = vld [vmem:[%s179] sm:$0xff]
    %v181 = vld [vmem:[%s179 + $0x8] sm:$0xff]
    %s182 = scalar_lea.vmem [#allocation6], 64
    %v183 = vld [vmem:[%s182] sm:$0xff]
    %v184 = vld [vmem:[%s182 + $0x8] sm:$0xff]
    %v185 = vsub.f32 %v180, %v183
    %v186 = vsub.f32 %v181, %v184
    %s187 = scalar_lea.vmem [#allocation3], 80
    %v188 = vld [vmem:[%s187] sm:$0xff]
    %v189 = vld [vmem:[%s187 + $0x8] sm:$0xff]
    %s190 = scalar_lea.vmem [#allocation6], 80
    %v191 = vld [vmem:[%s190] sm:$0xff]
    %v192 = vld [vmem:[%s190 + $0x8] sm:$0xff]
    %v193 = vsub.f32 %v188, %v191
    %v194 = vsub.f32 %v189, %v192
    %v195 = vadd.f32 %v185, %v193
    %v196 = vadd.f32 %v186, %v194
    %s197 = scalar_lea.vmem [#allocation3], 96
    %v198 = vld [vmem:[%s197] sm:$0xff]
    %v199 = vld [vmem:[%s197 + $0x8] sm:$0xff]
    %s200 = scalar_lea.vmem [#allocation6], 96
    %v201 = vld [vmem:[%s200] sm:$0xff]
    %v202 = vld [vmem:[%s200 + $0x8] sm:$0xff]
    %v203 = vsub.f32 %v198, %v201
    %v204 = vsub.f32 %v199, %v202
    %v205 = vadd.f32 %v195, %v203
    %v206 = vadd.f32 %v196, %v204
    %s207 = scalar_lea.vmem [#allocation3], 112
    %v208 = vld [vmem:[%s207] sm:$0xff]
    %v209 = vld [vmem:[%s207 + $0x8] sm:$0xff]
    %s210 = scalar_lea.vmem [#allocation6], 112
    %v211 = vld [vmem:[%s210] sm:$0xff]
    %v212 = vld [vmem:[%s210 + $0x8] sm:$0xff]
    %v213 = vsub.f32 %v208, %v211
    %v214 = vsub.f32 %v209, %v212
    %v215 = vadd.f32 %v205, %v213
    %v216 = vadd.f32 %v206, %v214
    %v217 = vmul.f32 %v215, 0.25
    %v218 = vmul.f32 %v216, 0.25
    %v219 = vrot.slane %v217, 7
    %v220 = vrot.slane %v218, 7
    %v221 = vsel %vm111, %v219, %v220
    %v222 = vsel %vm111, %v220, %v219
    %v223 = vsel %vm65, 0.0, %v222
    %v224 = vsel %vm66, 0.0, %v221
    %v225 = vmul.f32 %v217, 2.0
    %v226 = vmul.f32 %v218, 2.0
    %v227 = vadd.f32 %v223, %v225
    %v228 = vadd.f32 %v224, %v226
    %v229 = vrot.slane %v217, 1
    %v230 = vrot.slane %v218, 1
    %v231 = vsel %vm122, %v229, %v230
    %v232 = vsel %vm122, %v230, %v229
    %v233 = vsel %vm67, 0.0, %v231
    %v234 = vsel %vm68, 0.0, %v232
    %v235 = vadd.f32 %v227, %v233
    %v236 = vadd.f32 %v228, %v234
    %237 = vrot.lane.b32.xlu0 %v217, 1
    %v238 = vpop.permute.xlu0 %237
    %239 = vrot.lane.b32.xlu0 %v218, 1
    %v240 = vpop.permute.xlu0 %239
    %v241 = vsel %vm69, 0.0, %v238
    %v242 = vsel %vm69, 0.0, %v240
    %v243 = vadd.f32 %v241, %v225
    %v244 = vadd.f32 %v242, %v226
    %245 = vrot.lane.b32.xlu0 %v217, 127
    %v246 = vpop.permute.xlu0 %245
    %247 = vrot.lane.b32.xlu0 %v218, 127
    %v248 = vpop.permute.xlu0 %247
    %v249 = vsel %vm70, 0.0, %v246
    %v250 = vsel %vm70, 0.0, %v248
    %v251 = vadd.f32 %v243, %v249
    %v252 = vadd.f32 %v244, %v250
    %253 = vrot.lane.b32.xlu0 %v235, 127
    %v254 = vpop.permute.xlu0 %253
    %255 = vrot.lane.b32.xlu0 %v236, 127
    %v256 = vpop.permute.xlu0 %255
    %v257 = vsel %vm70, 0.0, %v254
    %v258 = vsel %vm70, 0.0, %v256
    %259 = vrot.lane.b32.xlu0 %v235, 1
    %v260 = vpop.permute.xlu0 %259
    %261 = vrot.lane.b32.xlu0 %v236, 1
    %v262 = vpop.permute.xlu0 %261
    %v263 = vsel %vm69, 0.0, %v260
    %v264 = vsel %vm69, 0.0, %v262
    %v265 = vsub.f32 %v257, %v263
    %v266 = vsub.f32 %v258, %v264
    %v267 = vrot.slane %v251, 1
    %v268 = vrot.slane %v252, 1
    %v269 = vsel %vm122, %v267, %v268
    %v270 = vsel %vm122, %v268, %v267
    %v271 = vsel %vm67, 0.0, %v269
    %v272 = vsel %vm68, 0.0, %v270
    %v273 = vrot.slane %v251, 7
    %v274 = vrot.slane %v252, 7
    %v275 = vsel %vm111, %v273, %v274
    %v276 = vsel %vm111, %v274, %v273
    %v277 = vsel %vm65, 0.0, %v276
    %v278 = vsel %vm66, 0.0, %v275
    %v279 = vsub.f32 %v271, %v277
    %v280 = vsub.f32 %v272, %v278
    %v281 = vand.u32 2147483647, %v265
    %v282 = vand.u32 2147483647, %v266
    %v283 = vand.u32 2147483647, %v279
    %v284 = vand.u32 2147483647, %v280
    %v285 = vadd.f32 %v281, %v283
    %v286 = vadd.f32 %v282, %v284
    %v287 = vadd.f32 %v177, %v285
    %v288 = vadd.f32 %v178, %v286
    %v289 = vld [vmem:[#allocation2] sm:$0xff]
    %v290 = vld [vmem:[#allocation2 + $0x8] sm:$0xff]
    %v291 = vadd.f32 %v289, %v287
    %v292 = vadd.f32 %v290, %v288
    %293 = vst [vmem:[#allocation2] sm:$0xff] %v291
    %294 = vst [vmem:[#allocation2 + $0x8] sm:$0xff] %v292
    // Predicated region
    $region22: #{tpu_custom_call.1} parent=1 // pred_check
      %p295 = pneg %p54
    $region23: #{tpu_custom_call.1} parent=1 // pred_check_branch
      %297 = sbr.rel (%p295) target = $region25
    $region24: #{tpu_custom_call.1} parent=1 // pred_region
      %v298 = vld [vmem:[#allocation2] sm:$0xff]
      %v299 = vld [vmem:[#allocation2 + $0x8] sm:$0xff]
      %v300 = vadd.f32 %v298, %v299
      %301 = vadd.xlane.f32.xlu0 %v300
      %v302 = vpop.xlane.xlu0 %301
      %v303 = vrot.slane %v302, 4
      %v304 = vadd.f32 %v302, %v303
      %v305 = vrot.slane %v304, 2
      %v306 = vadd.f32 %v304, %v305
      %v307 = vrot.slane %v306, 1
      %v308 = vadd.f32 %v306, %v307
      %s309 = vtos %v308
      %v310 = vstv %s309
      %v311 = vmul.f32 %v310, 0.00024414063
      %vm312 = vcmask 0
      %313 = vst.msk [vmem:[#allocation8] sm:$0x1] %vm312, %v311
    $region25: #{tpu_custom_call.1} parent=1 // pred_fallthru
      _
    // Predicated region
    $region26: #{tpu_custom_call.1} parent=1 // pred_check
      _
    $region27: #{tpu_custom_call.1} parent=1 // pred_check_branch
      %315 = sbr.rel (0) target = $region29
    $region28: #{tpu_custom_call.1} parent=1 // pred_region
      %s317 = ssub.s32 16, 16
      %318 = vsyncadd [#allocation5], %s317
      %s320 = sshll.u32 [#allocation8], 4
      %s321 = int_to_ptr.vmem [resolvable:$true] %s320
      %323 = dma.vmem_to_hbm [thread:$0]  %s321, 16, %s2, [#allocation5]
    $region29: #{tpu_custom_call.1} parent=1 // pred_fallthru
      _
    // Predicated region
    $region30: #{tpu_custom_call.1} parent=1 // pred_check
      _
    $region31: #{tpu_custom_call.1} parent=1 // pred_check_branch
      %325 = sbr.rel (0) target = $region33
    $region32: #{tpu_custom_call.1} parent=1 // pred_region
      %326 = dma.done [#allocation5], 16
    $region33: #{tpu_custom_call.1} parent=1 // pred_fallthru
      _
    %327 = vsyncpa [#allocation4], 1
    %328 = vsyncpa [#allocation7], 1
    %329 = vsyncpa [#allocation5], 1

</llo_original>
